<compile_context>
chip_gen: v6e
topology: v6e:2x2x1
jax: 0.10.0
libtpu: 0.0.40
codegen_flags: <defaults>
</compile_context>

<pallas_src>
import jax
import jax.numpy as jnp
from jax.experimental import pallas as pl
from jax.experimental.pallas import tpu as pltpu


def _round_up(x, m):
    return (x + m - 1) // m * m


def _pick_tile(padded, candidates):
    """Largest candidate that evenly divides `padded` (candidates descending)."""
    for c in candidates:
        if c <= padded and padded % c == 0:
            return c
    return padded


# Requested scoped-VMEM limit and the working-set budget we size tiles against.
_VMEM_LIMIT_BYTES = 48 * 1024 * 1024
_VMEM_BUDGET_BYTES = 36 * 1024 * 1024


# ---------------------------------------------------------------------------
# Kernels
# ---------------------------------------------------------------------------

def _linear_fullk_kernel(x_ref, w_ref, b_ref, o_ref):
    """Full-K tile: o = x @ w_t + b (no accumulator scratch, no epilogue branch).

    x_ref: (tm, K)  activation tile (resident across the class sweep)
    w_ref: (K, tn)  pre-transposed weight tile (standard MXU RHS layout)
    b_ref: (1, tn)  bias tile
    o_ref: (tm, tn) output tile
    """
    o_ref[...] = (
        jnp.dot(x_ref[...], w_ref[...], preferred_element_type=jnp.float32)
        + b_ref[...]
    ).astype(o_ref.dtype)


def _linear_splitk_kernel(x_ref, w_ref, b_ref, o_ref, acc_ref):
    """K-split tile: accumulate over the innermost K grid axis ('arbitrary')."""
    k = pl.program_id(2)

    @pl.when(k == 0)
    def _():
        acc_ref[...] = jnp.zeros_like(acc_ref)

    acc_ref[...] += jnp.dot(x_ref[...], w_ref[...],
                            preferred_element_type=jnp.float32)

    @pl.when(k == pl.num_programs(2) - 1)
    def _():
        o_ref[...] = (acc_ref[...] + b_ref[...]).astype(o_ref.dtype)


# ---------------------------------------------------------------------------
# Wrappers
# ---------------------------------------------------------------------------

def _forward_tiny(x, w_t, b2d):
    """Single full-array block, no padding / slicing (sub-tile problems only)."""
    B, F = x.shape
    C = w_t.shape[1]
    return pl.pallas_call(
        _linear_fullk_kernel,
        out_shape=jax.ShapeDtypeStruct((B, C), x.dtype),
        grid=(1,),
        in_specs=[
            pl.BlockSpec((B, F), lambda i: (0, 0)),
            pl.BlockSpec((F, C), lambda i: (0, 0)),
            pl.BlockSpec((1, C), lambda i: (0, 0)),
        ],
        out_specs=pl.BlockSpec((B, C), lambda i: (0, 0)),
        compiler_params=pltpu.CompilerParams(
            vmem_limit_bytes=_VMEM_LIMIT_BYTES),
        cost_estimate=pl.CostEstimate(
            flops=2 * B * F * C,
            transcendentals=0,
            bytes_accessed=4 * (B * F + F * C + C + B * C)),
    )(x, w_t, b2d)


def _forward_padded(x, w_t_pad, b_pad, C):
    """Tiled path: pad B to 8 / (F, C already padded to 128 multiples at init)."""
    B, F = x.shape
    Fp, Cp = w_t_pad.shape

    Bp = _round_up(B, 8)
    xp = x if (Bp == B and Fp == F) else jnp.pad(x, ((0, Bp - B), (0, Fp - F)))

    # --- M tile ---------------------------------------------------------
    if Bp <= 256:
        tm = Bp
    else:
        tm = _pick_tile(Bp, [256, 128, 64, 32, 16, 8])
    grid_m = Bp // tm

    # --- N tile (prefer >=2 blocks along classes for megacore when M has 1)
    n_cands = [512, 256, 128]
    if grid_m == 1:
        split = [c for c in n_cands if Cp % c == 0 and Cp // c >= 2]
        tn = split[0] if split else _pick_tile(Cp, n_cands)
    else:
        tn = _pick_tile(Cp, n_cands)
    grid_n = Cp // tn

    # --- K: full-K block if the double-buffered working set fits VMEM ----
    def footprint(tk, split_k):
        fp = 2 * 4 * (tm * tk + tk * tn + tn + tm * tn)  # f32, double-buffered
        if split_k:
            fp += 4 * tm * tn                            # accumulator scratch
        return fp

    if footprint(Fp, False) <= _VMEM_BUDGET_BYTES:
        split_k, tk = False, Fp
    else:
        split_k, tk = True, 128
        for c in [4096, 2048, 1024, 512, 256]:
            if Fp % c == 0 and footprint(c, True) <= _VMEM_BUDGET_BYTES:
                tk = c
                break

    if not split_k:
        # 2-D grid, class axis innermost -> x block resident across the sweep.
        out_padded = pl.pallas_call(
            _linear_fullk_kernel,
            out_shape=jax.ShapeDtypeStruct((Bp, Cp), x.dtype),
            grid=(grid_m, grid_n),
            in_specs=[
                pl.BlockSpec((tm, Fp), lambda i, j: (i, 0)),   # x (resident over j)
                pl.BlockSpec((Fp, tn), lambda i, j: (0, j)),   # W^T tile
                pl.BlockSpec((1, tn), lambda i, j: (0, j)),    # bias tile
            ],
            out_specs=pl.BlockSpec((tm, tn), lambda i, j: (i, j)),
            compiler_params=pltpu.CompilerParams(
                dimension_semantics=("parallel", "parallel"),
                vmem_limit_bytes=_VMEM_LIMIT_BYTES),
            cost_estimate=pl.CostEstimate(
                flops=2 * Bp * Fp * Cp,
                transcendentals=0,
                bytes_accessed=4 * (Bp * Fp + grid_m * Cp * Fp
                                    + grid_m * Cp + Bp * Cp)),
        )(xp, w_t_pad, b_pad)
    else:
        out_padded = pl.pallas_call(
            _linear_splitk_kernel,
            out_shape=jax.ShapeDtypeStruct((Bp, Cp), x.dtype),
            grid=(grid_m, grid_n, Fp // tk),
            in_specs=[
                pl.BlockSpec((tm, tk), lambda i, j, k: (i, k)),
                pl.BlockSpec((tk, tn), lambda i, j, k: (k, j)),
                pl.BlockSpec((1, tn), lambda i, j, k: (0, j)),
            ],
            out_specs=pl.BlockSpec((tm, tn), lambda i, j, k: (i, j)),
            scratch_shapes=[pltpu.VMEM((tm, tn), jnp.float32)],
            compiler_params=pltpu.CompilerParams(
                dimension_semantics=("parallel", "parallel", "arbitrary"),
                vmem_limit_bytes=_VMEM_LIMIT_BYTES),
            cost_estimate=pl.CostEstimate(
                flops=2 * Bp * Fp * Cp,
                transcendentals=0,
                bytes_accessed=4 * (grid_n * Bp * Fp + grid_m * Cp * Fp
                                    + grid_m * Cp + Bp * Cp)),
        )(xp, w_t_pad, b_pad)

    if Bp == B and Cp == C:
        return out_padded
    return out_padded[:B, :C]


def make_classifier(weight, bias):
    """Build forward(x) equivalent to torch.nn.Linear(fea_num, classes).

    weight: (classes, fea_num) in PyTorch layout; bias: (classes,).
    The weight is transposed / padded ONCE here (not per call).
    """
    weight = jnp.asarray(weight)
    bias = jnp.asarray(bias)
    C, F = weight.shape
    assert bias.shape == (C,)

    w_t = weight.T                    # (F, C): one-time transpose at init
    b2d = bias.reshape(1, C)

    Fp = _round_up(F, 128)
    Cp = _round_up(C, 128)
    if (Fp, Cp) == (F, C):
        w_t_pad, b_pad = w_t, b2d
    else:
        w_t_pad = jnp.pad(w_t, ((0, Fp - F), (0, Cp - C)))
        b_pad = jnp.pad(b2d, ((0, 0), (0, Cp - C)))

    def forward(x):
        B, Fx = x.shape
        assert Fx == F, "feature dim mismatch"
        # Sub-tile problems: single full-array block, no padding / output slice.
        if B <= 128 and C <= 128 and F <= 512:
            return _forward_tiny(x, w_t, b2d)
        return _forward_padded(x, w_t_pad, b_pad, C)

    return jax.jit(forward)


if __name__ == "__main__":
    # Small shapes consistent with the module: batch=8, fea_num=32, classes=16.
    B, FEA_NUM, CLASSES = 8, 32, 16

    key = jax.random.PRNGKey(0)
    kx, kw, kb = jax.random.split(key, 3)

    x = jax.random.normal(kx, (B, FEA_NUM), dtype=jnp.float32)

    # Deterministic params (PyTorch Linear default: U(-1/sqrt(F), 1/sqrt(F))).
    bound = 1.0 / (FEA_NUM ** 0.5)
    weight = jax.random.uniform(kw, (CLASSES, FEA_NUM),
                                minval=-bound, maxval=bound, dtype=jnp.float32)
    bias = jax.random.uniform(kb, (CLASSES,),
                              minval=-bound, maxval=bound, dtype=jnp.float32)

    forward = make_classifier(weight, bias)
    out = jax.block_until_ready(forward(x))
    ref = x @ weight.T + bias
    assert out.shape == (B, CLASSES)
    assert jnp.allclose(out, ref, atol=1e-5, rtol=1e-5)

    # Also exercise the tiled full-K path once (still small: 256 x 1024 x 384).
    B2, F2, C2 = 256, 1024, 384
    x2 = jax.random.normal(kx, (B2, F2), dtype=jnp.float32)
    w2 = jax.random.uniform(kw, (C2, F2), minval=-0.03, maxval=0.03,
                            dtype=jnp.float32)
    b2 = jax.random.uniform(kb, (C2,), minval=-0.03, maxval=0.03,
                            dtype=jnp.float32)
    out2 = jax.block_until_ready(make_classifier(w2, b2)(x2))
    ref2 = x2 @ w2.T + b2
    assert out2.shape == (B2, C2)
    assert jnp.allclose(out2, ref2, atol=1e-2, rtol=1e-2)

    print("KERNEL_OK")
</pallas_src>

<mosaic_0001>
module attributes {stable_mosaic.version = 11 : i64} {
  func.func @_linear_fullk_kernel(%arg0: i32, %arg1: memref<8x32xf32, #tpu.memory_space<vmem>>, %arg2: memref<32x16xf32, #tpu.memory_space<vmem>>, %arg3: memref<1x16xf32, #tpu.memory_space<vmem>>, %arg4: memref<8x16xf32, #tpu.memory_space<vmem>>) attributes {dimension_semantics = [#tpu.dimension_semantics<arbitrary>], iteration_bounds = array<i64: 1>, scalar_prefetch = 0 : i64, scratch_operands = 0 : i64, tpu.core_type = #tpu.core_type<tc>, window_params = [{pipeline_mode = #tpu.pipeline_mode<synchronous>, transform_indices = @transform_0, window_bounds = array<i64: 8, 32>}, {pipeline_mode = #tpu.pipeline_mode<synchronous>, transform_indices = @transform_1, window_bounds = array<i64: 32, 16>}, {pipeline_mode = #tpu.pipeline_mode<synchronous>, transform_indices = @transform_2, window_bounds = array<i64: 1, 16>}, {pipeline_mode = #tpu.pipeline_mode<synchronous>, transform_indices = @transform_3, window_bounds = array<i64: 8, 16>}]} {
    %c0 = arith.constant 0 : index
    %c0_0 = arith.constant 0 : index
    %0 = vector.load %arg1[%c0, %c0_0] : memref<8x32xf32, #tpu.memory_space<vmem>>, vector<8x32xf32>
    %c0_1 = arith.constant 0 : index
    %c0_2 = arith.constant 0 : index
    %1 = vector.load %arg2[%c0_1, %c0_2] : memref<32x16xf32, #tpu.memory_space<vmem>>, vector<32x16xf32>
    %cst = arith.constant dense<0.000000e+00> : vector<8x16xf32>
    %2 = tpu.matmul %0, %1, %cst {dimension_numbers = #tpu.dot_dimension_numbers<[1], [0], [0], [1], [0, 0, 1, 1], [], []>} : vector<8x32xf32>, vector<32x16xf32>, vector<8x16xf32> -> vector<8x16xf32>
    %c0_3 = arith.constant 0 : index
    %c0_4 = arith.constant 0 : index
    %3 = vector.load %arg3[%c0_3, %c0_4] : memref<1x16xf32, #tpu.memory_space<vmem>>, vector<1x16xf32>
    %4 = vector.broadcast %3 : vector<1x16xf32> to vector<8x16xf32>
    %5 = arith.addf %2, %4 : vector<8x16xf32>
    %c0_5 = arith.constant 0 : index
    %c0_6 = arith.constant 0 : index
    %6 = vector.load %arg4[%c0_5, %c0_6] : memref<8x16xf32, #tpu.memory_space<vmem>>, vector<8x16xf32>
    tpu.vector_store %arg4[%c0_5, %c0_6], %5 {strides = array<i32>} : memref<8x16xf32, #tpu.memory_space<vmem>>, vector<8x16xf32>,
    return
  }
  func.func @transform_0(%arg0: i32) -> (i32, i32) {
    %c0_i32 = arith.constant 0 : i32
    %c0_i32_0 = arith.constant 0 : i32
    %c0_i32_1 = arith.constant 0 : i32
    return %c0_i32, %c0_i32_0 : i32, i32
  }
  func.func @transform_1(%arg0: i32) -> (i32, i32) {
    %c0_i32 = arith.constant 0 : i32
    %c0_i32_0 = arith.constant 0 : i32
    %c0_i32_1 = arith.constant 0 : i32
    return %c0_i32, %c0_i32_0 : i32, i32
  }
  func.func @transform_2(%arg0: i32) -> (i32, i32) {
    %c0_i32 = arith.constant 0 : i32
    %c0_i32_0 = arith.constant 0 : i32
    %c0_i32_1 = arith.constant 0 : i32
    return %c0_i32, %c0_i32_0 : i32, i32
  }
  func.func @transform_3(%arg0: i32) -> (i32, i32) {
    %c0_i32 = arith.constant 0 : i32
    %c0_i32_0 = arith.constant 0 : i32
    %c0_i32_1 = arith.constant 0 : i32
    return %c0_i32, %c0_i32_0 : i32, i32
  }
}

</mosaic_0001>

<llo_original>
// kernel: forward.1
$region0: #{forward.1}
  #allocation0 [shape = 'u32[]', space=smem, size = 0x4, offset = 0x4, fixed_abs, tag = 'smem constant byte address 0x4 - core index']
  #allocation1 [shape = 'u32[144,128]{1,0:T(1,128)}', space=vmem, size = 0x12000, scoped, tag = 'internal scratch']
  %s0 = inlined_call_operand.hbm [shape: f32[8,32], index: 0, kind: input, shape index: {}]
  %s1 = inlined_call_operand.hbm [shape: f32[32,16], index: 1, kind: input, shape index: {}]
  %s2 = inlined_call_operand.vmem [shape: f32[1,16], index: 2, kind: input, shape index: {}]
  %s3 = inlined_call_operand.hbm [shape: f32[8,16], index: 3, kind: output, shape index: {}]
  %s4 = sld [smem:[#allocation0]]
  $region30: #{forward.1} parent=0
    _
  %s6 = ssub.s32 1, %s4
  %s7 = scalar_select 0, %s6, %s4
  $region1: #{forward.1} parent=0
    #allocation2 [shape = 'u8[4096]{0}', space=vmem, size = 0x1000, scoped, tag = 'input window, operand 0, single buffered']
    #allocation3 [shape = 's32[1]{0}', space=sflag, size = 0x4, scoped, tag = 'scoped memory for forward.1']
    #allocation4 [shape = 's32[1]{0}', space=sflag, size = 0x4, scoped, tag = 'scoped memory for forward.1']
    #allocation5 [shape = 'u8[16384]{0}', space=vmem, size = 0x4000, scoped, tag = 'input window, operand 1, single buffered']
    #allocation6 [shape = 's32[1]{0}', space=sflag, size = 0x4, scoped, tag = 'scoped memory for forward.1']
    #allocation7 [shape = 'u8[4096]{0}', space=vmem, size = 0x1000, scoped, tag = 'output window, operand 0, single buffered']
    %8 = vsyncpa [#allocation3], 0
    %9 = vsyncpa [#allocation6], 0
    %10 = vsyncpa [#allocation4], 0
    // Predicated region
    $region2: #{forward.1} parent=1 // pred_check
      _
    $region3: #{forward.1} parent=1 // pred_check_branch
      %12 = sbr.rel (0) target = $region5
    $region4: #{forward.1} parent=1 // pred_region
      %s14 = ssub.s32 128, 128
      %15 = vsyncadd [#allocation3], %s14
      %s17 = sshll.u32 [#allocation2], 4
      %s18 = int_to_ptr.vmem [resolvable:$true] %s17
      %20 = dma.hbm_to_vmem [thread:$0]  %s0, 128, %s18, [#allocation3]
    $region5: #{forward.1} parent=1 // pred_fallthru
      _
    // Predicated region
    $region6: #{forward.1} parent=1 // pred_check
      _
    $region7: #{forward.1} parent=1 // pred_check_branch
      %22 = sbr.rel (0) target = $region9
    $region8: #{forward.1} parent=1 // pred_region
      %s24 = ssub.s32 512, 512
      %25 = vsyncadd [#allocation6], %s24
      %s26 = sshll.u32 [#allocation5], 4
      %s27 = int_to_ptr.vmem [resolvable:$true] %s26
      %32 = dma.hbm_to_vmem [thread:$0]  %s1, 512, %s27, [#allocation6], 128, 128, 8
    $region9: #{forward.1} parent=1 // pred_fallthru
      _
    // Predicated region
    $region10: #{forward.1} parent=1 // pred_check
      _
    $region11: #{forward.1} parent=1 // pred_check_branch
      %34 = sbr.rel (0) target = $region13
    $region12: #{forward.1} parent=1 // pred_region
      _
    $region13: #{forward.1} parent=1 // pred_fallthru
      _
    // Predicated region
    $region14: #{forward.1} parent=1 // pred_check
      _
    $region15: #{forward.1} parent=1 // pred_check_branch
      %36 = sbr.rel (0) target = $region17
    $region16: #{forward.1} parent=1 // pred_region
      %37 = dma.done [#allocation3], 128
    $region17: #{forward.1} parent=1 // pred_fallthru
      _
    // Predicated region
    $region18: #{forward.1} parent=1 // pred_check
      _
    $region19: #{forward.1} parent=1 // pred_check_branch
      %39 = sbr.rel (0) target = $region21
    $region20: #{forward.1} parent=1 // pred_region
      %40 = dma.done [#allocation6], 512
    $region21: #{forward.1} parent=1 // pred_fallthru
      _
    %v41 = vld [vmem:[#allocation2] sm:$0xff]
    %v42 = vld [vmem:[#allocation5] sm:$0xff]
    %v43 = vld [vmem:[#allocation5 + $0x8] sm:$0xff]
    %v44 = vld [vmem:[#allocation5 + $0x10] sm:$0xff]
    %v45 = vld [vmem:[#allocation5 + $0x18] sm:$0xff]
    %v46 = vld [vmem:[%s2] sm:$0x1]
    %v48 = vlaneseq
    %v49 = vshrl.u32 %v48, 7
    %v50 = vsub.s32 0, %v49
    %v51 = vrot.slane %v46, %v50
    %vm53 = vcmask 261120
    %v55 = vsel %vm53, %v41, 0
    %57 = vmatprep.subr.mxu0 0.0
    %58 = vmatpush1.msra.mxu0 0.0
    %59 = vmatprep.subr.mxu0 0.0
    %60 = vmatpush1.msra.mxu0 0.0
    %61 = vmatprep.subr.mxu0 0.0
    %62 = vmatpush1.msra.mxu0 0.0
    %63 = vmatprep.subr.mxu0 0.0
    %64 = vmatpush1.msra.mxu0 0.0
    %65 = vmatprep.subr.mxu0 0.0
    %66 = vmatpush1.msra.mxu0 0.0
    %67 = vmatprep.subr.mxu0 0.0
    %68 = vmatpush1.msra.mxu0 0.0
    %69 = vmatprep.subr.mxu0 0.0
    %70 = vmatpush1.msra.mxu0 0.0
    %71 = vmatprep.subr.mxu0 0.0
    %72 = vmatpush1.msra.mxu0 0.0
    %73 = vmatprep.subr.mxu0 0.0
    %74 = vmatpush1.msra.mxu0 0.0
    %75 = vmatprep.subr.mxu0 0.0
    %76 = vmatpush1.msra.mxu0 0.0
    %77 = vmatprep.subr.mxu0 0.0
    %78 = vmatpush1.msra.mxu0 0.0
    %79 = vmatprep.subr.mxu0 0.0
    %80 = vmatpush1.msra.mxu0 0.0
    %81 = vmatprep.subr.mxu0 0.0
    %82 = vmatpush1.msra.mxu0 %v45
    %83 = vmatprep.subr.mxu0 0.0
    %84 = vmatpush1.msra.mxu0 %v44
    %85 = vmatprep.subr.mxu0 0.0
    %86 = vmatpush1.msra.mxu0 %v43
    %87 = vmatprep.subr.mxu0 0.0
    %88 = vmatpush1.msra.mxu0 %v42
    %89 = vmatprep.subr.mxu0 0.0
    %90 = vmatpush2.msra.mxu0 0.0
    %91 = vmatprep.subr.mxu0 0.0
    %92 = vmatpush2.msra.mxu0 0.0
    %93 = vmatprep.subr.mxu0 0.0
    %94 = vmatpush2.msra.mxu0 0.0
    %95 = vmatprep.subr.mxu0 0.0
    %96 = vmatpush2.msra.mxu0 0.0
    %97 = vmatprep.subr.mxu0 0.0
    %98 = vmatpush2.msra.mxu0 0.0
    %99 = vmatprep.subr.mxu0 0.0
    %100 = vmatpush2.msra.mxu0 0.0
    %101 = vmatprep.subr.mxu0 0.0
    %102 = vmatpush2.msra.mxu0 0.0
    %103 = vmatprep.subr.mxu0 0.0
    %104 = vmatpush2.msra.mxu0 0.0
    %105 = vmatprep.subr.mxu0 0.0
    %106 = vmatpush2.msra.mxu0 0.0
    %107 = vmatprep.subr.mxu0 0.0
    %108 = vmatpush2.msra.mxu0 0.0
    %109 = vmatprep.subr.mxu0 0.0
    %110 = vmatpush2.msra.mxu0 0.0
    %111 = vmatprep.subr.mxu0 0.0
    %112 = vmatpush2.msra.mxu0 0.0
    %113 = vmatprep.subr.mxu0 0.0
    %114 = vmatpush2.msra.mxu0 0.0
    %115 = vmatprep.subr.mxu0 0.0
    %116 = vmatpush2.msra.mxu0 0.0
    %117 = vmatprep.subr.mxu0 0.0
    %118 = vmatpush2.msra.mxu0 0.0
    %119 = vmatprep.subr.mxu0 0.0
    %120 = vmatpush2.msra.mxu0 0.0
    %121 = vmatprep.mubr.f32.mxu0 0.0
    %122 = vmatmul.mubr.f32.gmra.mxu0 %v55
    %v123 = vpop.f32.mrf.mxu0
    %v124 = vadd.f32 %v51, %v123
    %v125 = vpop.f32.mrf.mxu0
    %126 = vdwg.mxu0
    %vm127 = vcmask 130048
    %128 = vst.msk [vmem:[#allocation7] sm:$0xff] %vm127, %v124
    // Predicated region
    $region22: #{forward.1} parent=1 // pred_check
      _
    $region23: #{forward.1} parent=1 // pred_check_branch
      %130 = sbr.rel (0) target = $region25
    $region24: #{forward.1} parent=1 // pred_region
      %s132 = ssub.s32 128, 128
      %133 = vsyncadd [#allocation4], %s132
      %s135 = sshll.u32 [#allocation7], 4
      %s136 = int_to_ptr.vmem [resolvable:$true] %s135
      %138 = dma.vmem_to_hbm [thread:$0]  %s136, 128, %s3, [#allocation4]
    $region25: #{forward.1} parent=1 // pred_fallthru
      _
    // Predicated region
    $region26: #{forward.1} parent=1 // pred_check
      _
    $region27: #{forward.1} parent=1 // pred_check_branch
      %140 = sbr.rel (0) target = $region29
    $region28: #{forward.1} parent=1 // pred_region
      %141 = dma.done [#allocation4], 128
    $region29: #{forward.1} parent=1 // pred_fallthru
      _
    %142 = vsyncpa [#allocation3], 1
    %143 = vsyncpa [#allocation6], 1
    %144 = vsyncpa [#allocation4], 1

</llo_original>
